<compile_context>
chip_gen: v6e
topology: v6e:2x2x1
jax: 0.10.0
libtpu: 0.0.40
codegen_flags: <defaults>
</compile_context>

<pallas_src>
import jax
import jax.numpy as jnp
from jax import lax
from jax.experimental import pallas as pl
from jax.experimental.pallas import tpu as pltpu


# Contract the last dim of both operands: A(M,K) x B(N,K) -> (M,N)  (A @ B^T).
_NT_DIMS = (((1,), (1,)), ((), ()))


def dann_discriminator_kernel(x_ref, w1_ref, b1_ref, w2_ref, b2_ref,
                              w3_ref, b3_ref, o_ref):
    # x arrives in its native dtype; cast to bf16 on the VPU (hidden under DMA/MXU).
    x = x_ref[...].astype(w1_ref.dtype)                            # (TB, IN) bf16

    # ---- Layer 1: h1^T = relu(W1 @ x^T + b1), batch on the lane axis ----------
    h1 = lax.dot_general(w1_ref[...], x, dimension_numbers=_NT_DIMS,
                         preferred_element_type=jnp.float32)       # (H_p, TB) f32
    h1 = jnp.maximum(h1 + b1_ref[...], 0.0)        # bias (H_p,1) broadcasts on lanes
    # (dropout1: identity in eval mode)
    h1 = h1.astype(w2_ref.dtype)                   # bf16 for the next MXU pass

    # ---- Layer 2: h2^T = relu(W2 @ h1^T + b2) ---------------------------------
    h2 = jnp.dot(w2_ref[...], h1, preferred_element_type=jnp.float32)  # (H_p, TB) f32
    h2 = jnp.maximum(h2 + b2_ref[...], 0.0)
    # (dropout2: identity in eval mode)

    # ---- Layer 3 (output width 1): keep it off the MXU ------------------------
    # VPU multiply + sublane (XLU) reduce -> lane-dense (1, TB) logit row.
    logit = jnp.sum(h2 * w3_ref[...], axis=0, keepdims=True) + b3_ref[0, 0]

    # Exact sigmoid: only ~TB transcendental elements per tile, EUP has huge slack.
    o_ref[...] = (1.0 / (1.0 + jnp.exp(-logit))).astype(o_ref.dtype)


def _round_up(x, m):
    return (x + m - 1) // m * m


def prepare_dann_params(w1, b1, w2, b2, w3, b3, *, compute_dtype=jnp.bfloat16):
    """Pad/cast the constant parameters ONCE (hoisted out of the per-call path).

    w1: (hidden, in_feature), b1: (hidden,)   -- PyTorch nn.Linear layout
    w2: (hidden, hidden),     b2: (hidden,)
    w3: (1, hidden),          b3: (1,)
    Zero-padding of the hidden dim is exact: padded rows stay 0 through ReLU and
    contribute 0 to every dot product. The contraction dim (in_feature) is left
    unpadded since only the streamed operand x matters for HBM traffic.
    """
    H, IN = w1.shape
    f32 = jnp.float32
    # 128-align small H; 256-align large H to fill the 2x256^2 MXU on v6e/v7x
    # (128 is already native on v5e's 128x128 MXU).
    H_p = _round_up(H, 128) if H <= 128 else _round_up(H, 256)
    w1_p = jnp.zeros((H_p, IN), compute_dtype).at[:H, :].set(w1.astype(compute_dtype))
    w2_p = jnp.zeros((H_p, H_p), compute_dtype).at[:H, :H].set(w2.astype(compute_dtype))
    b1_p = jnp.zeros((H_p, 1), f32).at[:H, 0].set(b1.astype(f32))
    b2_p = jnp.zeros((H_p, 1), f32).at[:H, 0].set(b2.astype(f32))
    w3_p = jnp.zeros((H_p, 1), f32).at[:H, 0].set(w3.reshape(-1).astype(f32))
    b3_p = b3.reshape(1, 1).astype(f32)
    return w1_p, b1_p, w2_p, b2_p, w3_p, b3_p


def dann_discriminator_forward(x, params, *, block_b=512):
    """Forward pass of DANNDiscriminator (task_type='cls', eval mode).

    x      : (B, in_feature), any float dtype (streamed as-is, cast in-kernel).
    params : output of prepare_dann_params().
    Returns (B, 1) float32 probabilities.
    """
    assert block_b % 128 == 0, "block_b must be a multiple of 128"
    w1_p, b1_p, w2_p, b2_p, w3_p, b3_p = params
    B, IN = x.shape
    H_p = w1_p.shape[0]
    assert w1_p.shape[1] == IN, "x feature dim must match w1"

    # Batch tile: big enough to amortize the ~0.35 us/step pipeline overhead and
    # fill the MXU lanes; shrunk to a single lane-dense tile when B is small so
    # the grid is 1-2 steps (also balances v7x's two TensorCores).
    tb = min(block_b, _round_up(B, 128))
    num_tiles = pl.cdiv(B, tb)     # ragged last tile: OOB rows only produce
    B_pad = num_tiles * tb         # garbage in padded output lanes, sliced off below

    bw = jnp.dtype(w1_p.dtype).itemsize
    xw = jnp.dtype(x.dtype).itemsize

    # VMEM: double-buffered x/out tiles + (double-buffered) resident weights +
    # live f32 intermediates.
    # TODO(synk): at large H on v7x (64 MiB VMEM), single-buffer the constant-index
    #             weight specs (pipeline_mode=pl.Buffered(1)) or add an H grid axis.
    vmem_est = (2 * tb * IN * xw                      # x tiles
                + 2 * tb * 4                          # out tiles
                + 2 * (H_p * IN + H_p * H_p) * bw     # w1, w2
                + 2 * 3 * H_p * 4                     # b1, b2, w3 columns
                + 4 * H_p * tb * 4)                   # f32 intermediates
    vmem_limit = int(min(48 * 2**20, max(16 * 2**20, 2 * vmem_est)))

    cost = pl.CostEstimate(
        flops=2 * B_pad * (IN * H_p + H_p * H_p + H_p),
        transcendentals=B_pad,
        bytes_accessed=(x.size * xw + (H_p * IN + H_p * H_p) * bw
                        + 3 * H_p * 4 + B_pad * 4),
    )

    grid_spec = pltpu.PrefetchScalarGridSpec(
        num_scalar_prefetch=0,
        grid=(num_tiles,),
        in_specs=[
            pl.BlockSpec((tb, IN), lambda i: (i, 0)),         # x tile (pipelined, native dtype)
            pl.BlockSpec((H_p, IN), lambda i: (0, 0)),        # w1 (VMEM resident)
            pl.BlockSpec((H_p, 1), lambda i: (0, 0)),         # b1
            pl.BlockSpec((H_p, H_p), lambda i: (0, 0)),       # w2 (VMEM resident)
            pl.BlockSpec((H_p, 1), lambda i: (0, 0)),         # b2
            pl.BlockSpec((H_p, 1), lambda i: (0, 0)),         # w3 (as a column)
            pl.BlockSpec(memory_space=pltpu.MemorySpace.SMEM),  # b3 scalar in SMEM
        ],
        out_specs=pl.BlockSpec((1, tb), lambda i: (0, i)),    # lane-dense row
    )

    y_row = pl.pallas_call(
        dann_discriminator_kernel,
        out_shape=jax.ShapeDtypeStruct((1, B_pad), jnp.float32),
        grid_spec=grid_spec,
        compiler_params=pltpu.CompilerParams(
            dimension_semantics=("parallel",),   # batch tiles shard across TCs (v7x)
            vmem_limit_bytes=vmem_limit,
        ),
        cost_estimate=cost,
    )(x, w1_p, b1_p, w2_p, b2_p, w3_p, b3_p)

    return y_row[0, :B].reshape(B, 1)


def reference_forward(x, w1, b1, w2, b2, w3, b3):
    h1 = jnp.maximum(x @ w1.T + b1, 0.0)
    h2 = jnp.maximum(h1 @ w2.T + b2, 0.0)
    return jax.nn.sigmoid(h2 @ w3.T + b3)


if __name__ == "__main__":
    # Small shapes consistent with the module; batch=260 exercises a ragged,
    # non-128-multiple batch, features/hidden exercise sub-128 dims.
    B, IN_FEATURE, HIDDEN = 260, 32, 32

    key = jax.random.PRNGKey(0)
    kx, k1, kb1, k2, kb2, k3, kb3 = jax.random.split(key, 7)

    x = jax.random.normal(kx, (B, IN_FEATURE), jnp.float32)
    # Parameters in PyTorch nn.Linear layout: weight (out, in), bias (out,).
    w1 = jax.random.normal(k1, (HIDDEN, IN_FEATURE), jnp.float32) * 0.1
    b1 = jax.random.normal(kb1, (HIDDEN,), jnp.float32) * 0.01
    w2 = jax.random.normal(k2, (HIDDEN, HIDDEN), jnp.float32) * 0.1
    b2 = jax.random.normal(kb2, (HIDDEN,), jnp.float32) * 0.01
    w3 = jax.random.normal(k3, (1, HIDDEN), jnp.float32) * 0.1
    b3 = jax.random.normal(kb3, (1,), jnp.float32) * 0.01

    # Parameter padding / bf16 cast done once, outside the per-call path.
    params = prepare_dann_params(w1, b1, w2, b2, w3, b3)

    y = dann_discriminator_forward(x, params, block_b=512)
    y = jax.block_until_ready(y)

    y_ref = reference_forward(x, w1, b1, w2, b2, w3, b3)
    assert y.shape == (B, 1)
    max_err = float(jnp.max(jnp.abs(y - y_ref)))
    # bf16 matmuls in layers 1-2 vs f32 reference (dominant error term).
    assert max_err < 2e-2, (max_err, y[:4], y_ref[:4])

    print("KERNEL_OK")
</pallas_src>

<mosaic_0001>
module attributes {stable_mosaic.version = 11 : i64} {
  func.func @dann_discriminator_kernel(%arg0: i32, %arg1: memref<384x32xf32, #tpu.memory_space<vmem>>, %arg2: memref<128x32xbf16, #tpu.memory_space<vmem>>, %arg3: memref<128x1xf32, #tpu.memory_space<vmem>>, %arg4: memref<128x128xbf16, #tpu.memory_space<vmem>>, %arg5: memref<128x1xf32, #tpu.memory_space<vmem>>, %arg6: memref<128x1xf32, #tpu.memory_space<vmem>>, %arg7: memref<1x1xf32, #tpu.memory_space<smem>>, %arg8: memref<1x384xf32, #tpu.memory_space<vmem>>) attributes {dimension_semantics = [#tpu.dimension_semantics<parallel>], iteration_bounds = array<i64: 1>, scalar_prefetch = 0 : i64, scratch_operands = 0 : i64, tpu.core_type = #tpu.core_type<tc>, window_params = [{transform_indices = @transform_0, window_bounds = array<i64: 384, 32>}, {pipeline_mode = #tpu.pipeline_mode<synchronous>, transform_indices = @transform_1, window_bounds = array<i64: 128, 32>}, {pipeline_mode = #tpu.pipeline_mode<synchronous>, transform_indices = @transform_2, window_bounds = array<i64: 128, 1>}, {pipeline_mode = #tpu.pipeline_mode<synchronous>, transform_indices = @transform_3, window_bounds = array<i64: 128, 128>}, {pipeline_mode = #tpu.pipeline_mode<synchronous>, transform_indices = @transform_4, window_bounds = array<i64: 128, 1>}, {pipeline_mode = #tpu.pipeline_mode<synchronous>, transform_indices = @transform_5, window_bounds = array<i64: 128, 1>}, {transform_indices = @transform_6, window_bounds = array<i64: 1, 1>}, {transform_indices = @transform_7, window_bounds = array<i64: 1, 384>}]} {
    %c0 = arith.constant 0 : index
    %c0_0 = arith.constant 0 : index
    %0 = vector.load %arg1[%c0, %c0_0] : memref<384x32xf32, #tpu.memory_space<vmem>>, vector<384x32xf32>
    %1 = arith.truncf %0 : vector<384x32xf32> to vector<384x32xbf16>
    %c0_1 = arith.constant 0 : index
    %c0_2 = arith.constant 0 : index
    %2 = vector.load %arg2[%c0_1, %c0_2] : memref<128x32xbf16, #tpu.memory_space<vmem>>, vector<128x32xbf16>
    %cst = arith.constant dense<0.000000e+00> : vector<128x384xf32>
    %3 = tpu.matmul %2, %1, %cst {dimension_numbers = #tpu.dot_dimension_numbers<[1], [1], [0], [0], [0, 0, 1, 0], [], []>} : vector<128x32xbf16>, vector<384x32xbf16>, vector<128x384xf32> -> vector<128x384xf32>
    %c0_3 = arith.constant 0 : index
    %c0_4 = arith.constant 0 : index
    %4 = vector.load %arg3[%c0_3, %c0_4] : memref<128x1xf32, #tpu.memory_space<vmem>>, vector<128x1xf32>
    %5 = vector.broadcast %4 : vector<128x1xf32> to vector<128x384xf32>
    %6 = arith.addf %3, %5 : vector<128x384xf32>
    %cst_5 = arith.constant 0.000000e+00 : f32
    %7 = vector.broadcast %cst_5 : f32 to vector<128x384xf32>
    %8 = arith.maximumf %6, %7 : vector<128x384xf32>
    %9 = arith.truncf %8 : vector<128x384xf32> to vector<128x384xbf16>
    %c0_6 = arith.constant 0 : index
    %c0_7 = arith.constant 0 : index
    %10 = vector.load %arg4[%c0_6, %c0_7] : memref<128x128xbf16, #tpu.memory_space<vmem>>, vector<128x128xbf16>
    %cst_8 = arith.constant dense<0.000000e+00> : vector<128x384xf32>
    %11 = tpu.matmul %10, %9, %cst_8 {dimension_numbers = #tpu.dot_dimension_numbers<[1], [0], [0], [1], [0, 0, 1, 1], [], []>} : vector<128x128xbf16>, vector<128x384xbf16>, vector<128x384xf32> -> vector<128x384xf32>
    %c0_9 = arith.constant 0 : index
    %c0_10 = arith.constant 0 : index
    %12 = vector.load %arg5[%c0_9, %c0_10] : memref<128x1xf32, #tpu.memory_space<vmem>>, vector<128x1xf32>
    %13 = vector.broadcast %12 : vector<128x1xf32> to vector<128x384xf32>
    %14 = arith.addf %11, %13 : vector<128x384xf32>
    %cst_11 = arith.constant 0.000000e+00 : f32
    %15 = vector.broadcast %cst_11 : f32 to vector<128x384xf32>
    %16 = arith.maximumf %14, %15 : vector<128x384xf32>
    %c0_12 = arith.constant 0 : index
    %c0_13 = arith.constant 0 : index
    %17 = vector.load %arg6[%c0_12, %c0_13] : memref<128x1xf32, #tpu.memory_space<vmem>>, vector<128x1xf32>
    %18 = vector.broadcast %17 : vector<128x1xf32> to vector<128x384xf32>
    %19 = arith.mulf %16, %18 : vector<128x384xf32>
    %cst_14 = arith.constant dense<0.000000e+00> : vector<384xf32>
    %20 = vector.multi_reduction <add>, %19, %cst_14 [0] : vector<128x384xf32> to vector<384xf32>
    %21 = vector.shape_cast %20 : vector<384xf32> to vector<1x384xf32>
    %c0_15 = arith.constant 0 : index
    %c0_16 = arith.constant 0 : index
    %22 = memref.load %arg7[%c0_15, %c0_16] : memref<1x1xf32, #tpu.memory_space<smem>>
    %23 = vector.broadcast %22 : f32 to vector<1x384xf32>
    %24 = arith.addf %21, %23 : vector<1x384xf32>
    %cst_17 = arith.constant 0.000000e+00 : f32
    %25 = vector.broadcast %cst_17 : f32 to vector<1x384xf32>
    %26 = arith.subf %25, %24 : vector<1x384xf32>
    %27 = math.exp %26 : vector<1x384xf32>
    %cst_18 = arith.constant 1.000000e+00 : f32
    %28 = vector.broadcast %cst_18 : f32 to vector<1x384xf32>
    %29 = arith.addf %28, %27 : vector<1x384xf32>
    %cst_19 = arith.constant 1.000000e+00 : f32
    %30 = vector.broadcast %cst_19 : f32 to vector<1x384xf32>
    %31 = arith.divf %30, %29 : vector<1x384xf32>
    %c0_20 = arith.constant 0 : index
    %c0_21 = arith.constant 0 : index
    %32 = vector.load %arg8[%c0_20, %c0_21] : memref<1x384xf32, #tpu.memory_space<vmem>>, vector<1x384xf32>
    tpu.vector_store %arg8[%c0_20, %c0_21], %31 {strides = array<i32>} : memref<1x384xf32, #tpu.memory_space<vmem>>, vector<1x384xf32>,
    return
  }
  func.func @transform_0(%arg0: i32) -> (i32, i32) {
    %c0_i32 = arith.constant 0 : i32
    %c0_i32_0 = arith.constant 0 : i32
    return %arg0, %c0_i32 : i32, i32
  }
  func.func @transform_1(%arg0: i32) -> (i32, i32) {
    %c0_i32 = arith.constant 0 : i32
    %c0_i32_0 = arith.constant 0 : i32
    %c0_i32_1 = arith.constant 0 : i32
    return %c0_i32, %c0_i32_0 : i32, i32
  }
  func.func @transform_2(%arg0: i32) -> (i32, i32) {
    %c0_i32 = arith.constant 0 : i32
    %c0_i32_0 = arith.constant 0 : i32
    %c0_i32_1 = arith.constant 0 : i32
    return %c0_i32, %c0_i32_0 : i32, i32
  }
  func.func @transform_3(%arg0: i32) -> (i32, i32) {
    %c0_i32 = arith.constant 0 : i32
    %c0_i32_0 = arith.constant 0 : i32
    %c0_i32_1 = arith.constant 0 : i32
    return %c0_i32, %c0_i32_0 : i32, i32
  }
  func.func @transform_4(%arg0: i32) -> (i32, i32) {
    %c0_i32 = arith.constant 0 : i32
    %c0_i32_0 = arith.constant 0 : i32
    %c0_i32_1 = arith.constant 0 : i32
    return %c0_i32, %c0_i32_0 : i32, i32
  }
  func.func @transform_5(%arg0: i32) -> (i32, i32) {
    %c0_i32 = arith.constant 0 : i32
    %c0_i32_0 = arith.constant 0 : i32
    %c0_i32_1 = arith.constant 0 : i32
    return %c0_i32, %c0_i32_0 : i32, i32
  }
  func.func @transform_6(%arg0: i32) -> (i32, i32) {
    %c0_i32 = arith.constant 0 : i32
    %c0_i32_0 = arith.constant 0 : i32
    %c0_i32_1 = arith.constant 0 : i32
    return %c0_i32, %c0_i32_0 : i32, i32
  }
  func.func @transform_7(%arg0: i32) -> (i32, i32) {
    %c0_i32 = arith.constant 0 : i32
    %c0_i32_0 = arith.constant 0 : i32
    return %c0_i32, %arg0 : i32, i32
  }
}

</mosaic_0001>

<llo_original>
// kernel: tpu_custom_call.1
$region0: #{tpu_custom_call.1}
  #allocation0 [shape = 'u32[]', space=smem, size = 0x4, offset = 0x4, fixed_abs, tag = 'smem constant byte address 0x4 - core index']
  #allocation1 [shape = 'u32[144,128]{1,0:T(1,128)}', space=vmem, size = 0x12000, scoped, tag = 'internal scratch']
  #allocation2 [shape = 'f32[1,1]{1,0:T(1,128)S(6)}', space=smem, size = 0x200, scoped, tag = 'scoped memory for tpu_custom_call.1']
  %s0 = inlined_call_operand.vmem [shape: f32[260,32], index: 0, kind: input, shape index: {}]
  %s1 = inlined_call_operand.vmem [shape: bf16[128,32], index: 1, kind: input, shape index: {}]
  %s2 = inlined_call_operand.vmem [shape: f32[128,1], index: 2, kind: input, shape index: {}]
  %s3 = inlined_call_operand.vmem [shape: bf16[128,128], index: 3, kind: input, shape index: {}]
  %s4 = inlined_call_operand.vmem [shape: f32[128,1], index: 4, kind: input, shape index: {}]
  %s5 = inlined_call_operand.vmem [shape: f32[128,1], index: 5, kind: input, shape index: {}]
  %s6 = inlined_call_operand.<no memory space> [shape: f32[1,1], index: 6, kind: input, shape index: {}]
  %s7 = inlined_call_operand.hbm [shape: f32[1,384], index: 7, kind: output, shape index: {}]
  %s8 = sld [smem:[#allocation0]]
  $region38: #{tpu_custom_call.1} parent=0
    _
  %s10 = ssub.s32 1, %s8
  %s11 = scalar_select 0, %s10, %s8
  %12 = sst [smem:[#allocation2]] %s6
  $region1: #{tpu_custom_call.1} parent=0
    #allocation3 [shape = 'u8[1536]{0}', space=vmem, size = 0x800, scoped, tag = 'output window, operand 0, single buffered']
    #allocation4 [shape = 's32[1]{0}', space=sflag, size = 0x4, scoped, tag = 'scoped memory for tpu_custom_call.1']
    %13 = vsyncpa [#allocation4], 0
    // Predicated region
    $region2: #{tpu_custom_call.1} parent=1 // pred_check
      _
    $region3: #{tpu_custom_call.1} parent=1 // pred_check_branch
      %15 = sbr.rel (0) target = $region5
    $region4: #{tpu_custom_call.1} parent=1 // pred_region
      _
    $region5: #{tpu_custom_call.1} parent=1 // pred_fallthru
      _
    // Predicated region
    $region6: #{tpu_custom_call.1} parent=1 // pred_check
      _
    $region7: #{tpu_custom_call.1} parent=1 // pred_check_branch
      %17 = sbr.rel (0) target = $region9
    $region8: #{tpu_custom_call.1} parent=1 // pred_region
      _
    $region9: #{tpu_custom_call.1} parent=1 // pred_fallthru
      _
    // Predicated region
    $region10: #{tpu_custom_call.1} parent=1 // pred_check
      _
    $region11: #{tpu_custom_call.1} parent=1 // pred_check_branch
      %19 = sbr.rel (0) target = $region13
    $region12: #{tpu_custom_call.1} parent=1 // pred_region
      _
    $region13: #{tpu_custom_call.1} parent=1 // pred_fallthru
      _
    // Predicated region
    $region14: #{tpu_custom_call.1} parent=1 // pred_check
      _
    $region15: #{tpu_custom_call.1} parent=1 // pred_check_branch
      %21 = sbr.rel (0) target = $region17
    $region16: #{tpu_custom_call.1} parent=1 // pred_region
      _
    $region17: #{tpu_custom_call.1} parent=1 // pred_fallthru
      _
    // Predicated region
    $region18: #{tpu_custom_call.1} parent=1 // pred_check
      _
    $region19: #{tpu_custom_call.1} parent=1 // pred_check_branch
      %23 = sbr.rel (0) target = $region21
    $region20: #{tpu_custom_call.1} parent=1 // pred_region
      _
    $region21: #{tpu_custom_call.1} parent=1 // pred_fallthru
      _
    // Predicated region
    $region22: #{tpu_custom_call.1} parent=1 // pred_check
      _
    $region23: #{tpu_custom_call.1} parent=1 // pred_check_branch
      %25 = sbr.rel (0) target = $region25
    $region24: #{tpu_custom_call.1} parent=1 // pred_region
      _
    $region25: #{tpu_custom_call.1} parent=1 // pred_fallthru
      _
    // Predicated region
    $region26: #{tpu_custom_call.1} parent=1 // pred_check
      _
    $region27: #{tpu_custom_call.1} parent=1 // pred_check_branch
      %27 = sbr.rel (0) target = $region29
    $region28: #{tpu_custom_call.1} parent=1 // pred_region
      _
    $region29: #{tpu_custom_call.1} parent=1 // pred_fallthru
      _
    %v29 = vld [vmem:[%s0] sm:$0xff]
    %v30 = vld [vmem:[%s0 + $0x8] sm:$0xff]
    %v31 = vld [vmem:[%s0 + $0x10] sm:$0xff]
    %v32 = vld [vmem:[%s0 + $0x18] sm:$0xff]
    %v33 = vld [vmem:[%s0 + $0x20] sm:$0xff]
    %v34 = vld [vmem:[%s0 + $0x28] sm:$0xff]
    %v35 = vld [vmem:[%s0 + $0x30] sm:$0xff]
    %v36 = vld [vmem:[%s0 + $0x38] sm:$0xff]
    %v37 = vld [vmem:[%s0 + $0x40] sm:$0xff]
    %v38 = vld [vmem:[%s0 + $0x48] sm:$0xff]
    %v39 = vld [vmem:[%s0 + $0x50] sm:$0xff]
    %v40 = vld [vmem:[%s0 + $0x58] sm:$0xff]
    %v41 = vld [vmem:[%s0 + $0x60] sm:$0xff]
    %v42 = vld [vmem:[%s0 + $0x68] sm:$0xff]
    %v43 = vld [vmem:[%s0 + $0x70] sm:$0xff]
    %v44 = vld [vmem:[%s0 + $0x78] sm:$0xff]
    %v45 = vld [vmem:[%s0 + $0x80] sm:$0xff]
    %v46 = vld [vmem:[%s0 + $0x88] sm:$0xff]
    %v47 = vld [vmem:[%s0 + $0x90] sm:$0xff]
    %v48 = vld [vmem:[%s0 + $0x98] sm:$0xff]
    %v49 = vld [vmem:[%s0 + $0xa0] sm:$0xff]
    %v50 = vld [vmem:[%s0 + $0xa8] sm:$0xff]
    %v51 = vld [vmem:[%s0 + $0xb0] sm:$0xff]
    %v52 = vld [vmem:[%s0 + $0xb8] sm:$0xff]
    %v53 = vld [vmem:[%s0 + $0xc0] sm:$0xff]
    %v54 = vld [vmem:[%s0 + $0xc8] sm:$0xff]
    %v55 = vld [vmem:[%s0 + $0xd0] sm:$0xff]
    %v56 = vld [vmem:[%s0 + $0xd8] sm:$0xff]
    %v57 = vld [vmem:[%s0 + $0xe0] sm:$0xff]
    %v58 = vld [vmem:[%s0 + $0xe8] sm:$0xff]
    %v59 = vld [vmem:[%s0 + $0xf0] sm:$0xff]
    %v60 = vld [vmem:[%s0 + $0xf8] sm:$0xff]
    %v61 = vld [vmem:[%s0 + $0x100] sm:$0xff]
    %v62 = vld [vmem:[%s0 + $0x108] sm:$0xff]
    %v63 = vld [vmem:[%s0 + $0x110] sm:$0xff]
    %v64 = vld [vmem:[%s0 + $0x118] sm:$0xff]
    %v65 = vld [vmem:[%s0 + $0x120] sm:$0xff]
    %v66 = vld [vmem:[%s0 + $0x128] sm:$0xff]
    %v67 = vld [vmem:[%s0 + $0x130] sm:$0xff]
    %v68 = vld [vmem:[%s0 + $0x138] sm:$0xff]
    %v69 = vld [vmem:[%s0 + $0x140] sm:$0xff]
    %v70 = vld [vmem:[%s0 + $0x148] sm:$0xff]
    %v71 = vld [vmem:[%s0 + $0x150] sm:$0xff]
    %v72 = vld [vmem:[%s0 + $0x158] sm:$0xff]
    %v73 = vld [vmem:[%s0 + $0x160] sm:$0xff]
    %v74 = vld [vmem:[%s0 + $0x168] sm:$0xff]
    %v75 = vld [vmem:[%s0 + $0x170] sm:$0xff]
    %v76 = vld [vmem:[%s0 + $0x178] sm:$0xff]
    %v77 = vpack.c.bf16 %v30, %v29
    %v78 = vpack.c.bf16 %v32, %v31
    %v79 = vpack.c.bf16 %v34, %v33
    %v80 = vpack.c.bf16 %v36, %v35
    %v81 = vpack.c.bf16 %v38, %v37
    %v82 = vpack.c.bf16 %v40, %v39
    %v83 = vpack.c.bf16 %v42, %v41
    %v84 = vpack.c.bf16 %v44, %v43
    %v85 = vpack.c.bf16 %v46, %v45
    %v86 = vpack.c.bf16 %v48, %v47
    %v87 = vpack.c.bf16 %v50, %v49
    %v88 = vpack.c.bf16 %v52, %v51
    %v89 = vpack.c.bf16 %v54, %v53
    %v90 = vpack.c.bf16 %v56, %v55
    %v91 = vpack.c.bf16 %v58, %v57
    %v92 = vpack.c.bf16 %v60, %v59
    %v93 = vpack.c.bf16 %v62, %v61
    %v94 = vpack.c.bf16 %v64, %v63
    %v95 = vpack.c.bf16 %v66, %v65
    %v96 = vpack.c.bf16 %v68, %v67
    %v97 = vpack.c.bf16 %v70, %v69
    %v98 = vpack.c.bf16 %v72, %v71
    %v99 = vpack.c.bf16 %v74, %v73
    %v100 = vpack.c.bf16 %v76, %v75
    %v101 = vld [vmem:[%s1] sm:$0xf]
    %v102 = vld [vmem:[%s1 + $0x4] sm:$0xf]
    %v103 = vld [vmem:[%s1 + $0x8] sm:$0xf]
    %v104 = vld [vmem:[%s1 + $0xc] sm:$0xf]
    %v105 = vld [vmem:[%s1 + $0x10] sm:$0xf]
    %v106 = vld [vmem:[%s1 + $0x14] sm:$0xf]
    %v107 = vld [vmem:[%s1 + $0x18] sm:$0xf]
    %v108 = vld [vmem:[%s1 + $0x1c] sm:$0xf]
    %v109 = vld [vmem:[%s1 + $0x20] sm:$0xf]
    %v110 = vld [vmem:[%s1 + $0x24] sm:$0xf]
    %v111 = vld [vmem:[%s1 + $0x28] sm:$0xf]
    %v112 = vld [vmem:[%s1 + $0x2c] sm:$0xf]
    %v113 = vld [vmem:[%s1 + $0x30] sm:$0xf]
    %v114 = vld [vmem:[%s1 + $0x34] sm:$0xf]
    %v115 = vld [vmem:[%s1 + $0x38] sm:$0xf]
    %v116 = vld [vmem:[%s1 + $0x3c] sm:$0xf]
    %v117 = vld [vmem:[%s2] sm:$0xff]
    %v118 = vld [vmem:[%s2 + $0x8] sm:$0xff]
    %v119 = vld [vmem:[%s2 + $0x10] sm:$0xff]
    %v120 = vld [vmem:[%s2 + $0x18] sm:$0xff]
    %v121 = vld [vmem:[%s2 + $0x20] sm:$0xff]
    %v122 = vld [vmem:[%s2 + $0x28] sm:$0xff]
    %v123 = vld [vmem:[%s2 + $0x30] sm:$0xff]
    %v124 = vld [vmem:[%s2 + $0x38] sm:$0xff]
    %v125 = vld [vmem:[%s2 + $0x40] sm:$0xff]
    %v126 = vld [vmem:[%s2 + $0x48] sm:$0xff]
    %v127 = vld [vmem:[%s2 + $0x50] sm:$0xff]
    %v128 = vld [vmem:[%s2 + $0x58] sm:$0xff]
    %v129 = vld [vmem:[%s2 + $0x60] sm:$0xff]
    %v130 = vld [vmem:[%s2 + $0x68] sm:$0xff]
    %v131 = vld [vmem:[%s2 + $0x70] sm:$0xff]
    %v132 = vld [vmem:[%s2 + $0x78] sm:$0xff]
    %134 = vset.pattern.permute.xlu0 0
    %135 = vperm.xlu0 %134, %v117
    %v136 = vpop.permute.xlu0 %135
    %139 = vset.pattern.permute.xlu0 0
    %140 = vperm.xlu0 %139, %v118
    %v141 = vpop.permute.xlu0 %140
    %144 = vset.pattern.permute.xlu0 0
    %145 = vperm.xlu0 %144, %v119
    %v146 = vpop.permute.xlu0 %145
    %149 = vset.pattern.permute.xlu0 0
    %150 = vperm.xlu0 %149, %v120
    %v151 = vpop.permute.xlu0 %150
    %154 = vset.pattern.permute.xlu0 0
    %155 = vperm.xlu0 %154, %v121
    %v156 = vpop.permute.xlu0 %155
    %159 = vset.pattern.permute.xlu0 0
    %160 = vperm.xlu0 %159, %v122
    %v161 = vpop.permute.xlu0 %160
    %164 = vset.pattern.permute.xlu0 0
    %165 = vperm.xlu0 %164, %v123
    %v166 = vpop.permute.xlu0 %165
    %169 = vset.pattern.permute.xlu0 0
    %170 = vperm.xlu0 %169, %v124
    %v171 = vpop.permute.xlu0 %170
    %174 = vset.pattern.permute.xlu0 0
    %175 = vperm.xlu0 %174, %v125
    %v176 = vpop.permute.xlu0 %175
    %179 = vset.pattern.permute.xlu0 0
    %180 = vperm.xlu0 %179, %v126
    %v181 = vpop.permute.xlu0 %180
    %184 = vset.pattern.permute.xlu0 0
    %185 = vperm.xlu0 %184, %v127
    %v186 = vpop.permute.xlu0 %185
    %189 = vset.pattern.permute.xlu0 0
    %190 = vperm.xlu0 %189, %v128
    %v191 = vpop.permute.xlu0 %190
    %194 = vset.pattern.permute.xlu0 0
    %195 = vperm.xlu0 %194, %v129
    %v196 = vpop.permute.xlu0 %195
    %199 = vset.pattern.permute.xlu0 0
    %200 = vperm.xlu0 %199, %v130
    %v201 = vpop.permute.xlu0 %200
    %204 = vset.pattern.permute.xlu0 0
    %205 = vperm.xlu0 %204, %v131
    %v206 = vpop.permute.xlu0 %205
    %209 = vset.pattern.permute.xlu0 0
    %210 = vperm.xlu0 %209, %v132
    %v211 = vpop.permute.xlu0 %210
    %v229 = vunpack.c.l.b16 %v101
    %v230 = vunpack.c.l.b16 %v102
    %v231 = vunpack.c.l.b16 %v103
    %v232 = vunpack.c.l.b16 %v104
    %v233 = vunpack.c.l.b16 %v105
    %v234 = vunpack.c.l.b16 %v106
    %v235 = vunpack.c.l.b16 %v107
    %v236 = vunpack.c.l.b16 %v108
    %v237 = vunpack.c.l.b16 %v109
    %v238 = vunpack.c.l.b16 %v110
    %v239 = vunpack.c.l.b16 %v111
    %v240 = vunpack.c.l.b16 %v112
    %v241 = vunpack.c.l.b16 %v113
    %v242 = vunpack.c.l.b16 %v114
    %v243 = vunpack.c.l.b16 %v115
    %v244 = vunpack.c.l.b16 %v116
    %v245 = vpack.c.b16 %v230, %v229
    %v246 = vpack.c.b16 %v232, %v231
    %v247 = vpack.c.b16 %v234, %v233
    %v248 = vpack.c.b16 %v236, %v235
    %v249 = vpack.c.b16 %v238, %v237
    %v250 = vpack.c.b16 %v240, %v239
    %v251 = vpack.c.b16 %v242, %v241
    %v252 = vpack.c.b16 %v244, %v243
    %vm253 = vcmask 261120
    %v255 = vsel %vm253, %v245, 0
    %v258 = vsel %vm253, %v246, 0
    %v261 = vsel %vm253, %v247, 0
    %v264 = vsel %vm253, %v248, 0
    %v267 = vsel %vm253, %v249, 0
    %v270 = vsel %vm253, %v250, 0
    %v273 = vsel %vm253, %v251, 0
    %v276 = vsel %vm253, %v252, 0
    %v279 = vsel %vm253, %v77, 0
    %v282 = vsel %vm253, %v78, 0
    %v285 = vsel %vm253, %v79, 0
    %v288 = vsel %vm253, %v80, 0
    %v291 = vsel %vm253, %v81, 0
    %v294 = vsel %vm253, %v82, 0
    %v297 = vsel %vm253, %v83, 0
    %v300 = vsel %vm253, %v84, 0
    %v303 = vsel %vm253, %v85, 0
    %v306 = vsel %vm253, %v86, 0
    %v309 = vsel %vm253, %v87, 0
    %v312 = vsel %vm253, %v88, 0
    %v315 = vsel %vm253, %v89, 0
    %v318 = vsel %vm253, %v90, 0
    %v321 = vsel %vm253, %v91, 0
    %v324 = vsel %vm253, %v92, 0
    %v327 = vsel %vm253, %v93, 0
    %v330 = vsel %vm253, %v94, 0
    %v333 = vsel %vm253, %v95, 0
    %v336 = vsel %vm253, %v96, 0
    %v339 = vsel %vm253, %v97, 0
    %v342 = vsel %vm253, %v98, 0
    %v345 = vsel %vm253, %v99, 0
    %v348 = vsel %vm253, %v100, 0
    %350 = vmatprep.subr.bf16.mxu0 0
    %351 = vmatpush1.bf16.xpose.msra.mxu0 %v300
    %352 = vmatprep.subr.bf16.mxu0 0
    %353 = vmatpush1.bf16.xpose.msra.mxu0 %v297
    %354 = vmatprep.subr.bf16.mxu0 0
    %355 = vmatpush1.bf16.xpose.msra.mxu0 %v294
    %356 = vmatprep.subr.bf16.mxu0 0
    %357 = vmatpush1.bf16.xpose.msra.mxu0 %v291
    %358 = vmatprep.subr.bf16.mxu0 0
    %359 = vmatpush1.bf16.xpose.msra.mxu0 %v288
    %360 = vmatprep.subr.bf16.mxu0 0
    %361 = vmatpush1.bf16.xpose.msra.mxu0 %v285
    %362 = vmatprep.subr.bf16.mxu0 0
    %363 = vmatpush1.bf16.xpose.msra.mxu0 %v282
    %364 = vmatprep.subr.bf16.mxu0 0
    %365 = vmatpush1.bf16.xpose.msra.mxu0 %v279
    %366 = vmatprep.subr.bf16.mxu0 0
    %367 = vmatpush2.bf16.xpose.msra.mxu0 %v324
    %368 = vmatprep.subr.bf16.mxu0 0
    %369 = vmatpush2.bf16.xpose.msra.mxu0 %v321
    %370 = vmatprep.subr.bf16.mxu0 0
    %371 = vmatpush2.bf16.xpose.msra.mxu0 %v318
    %372 = vmatprep.subr.bf16.mxu0 0
    %373 = vmatpush2.bf16.xpose.msra.mxu0 %v315
    %374 = vmatprep.subr.bf16.mxu0 0
    %375 = vmatpush2.bf16.xpose.msra.mxu0 %v312
    %376 = vmatprep.subr.bf16.mxu0 0
    %377 = vmatpush2.bf16.xpose.msra.mxu0 %v309
    %378 = vmatprep.subr.bf16.mxu0 0
    %379 = vmatpush2.bf16.xpose.msra.mxu0 %v306
    %380 = vmatprep.subr.bf16.mxu0 0
    %381 = vmatpush2.bf16.xpose.msra.mxu0 %v303
    %382 = vmatprep.mubr.bf16.mxu0 0
    %383 = vmatmul.mubr.bf16.gmra.mxu0 %v255
    %v384 = vpop.f32.mrf.mxu0
    %v385 = vadd.f32 %v136, %v384
    %v386 = vpop.f32.mrf.mxu0
    %v387 = vadd.f32 %v136, %v386
    %v388 = vpop.f32.mrf.mxu0
    %v389 = vadd.f32 %v141, %v388
    %v390 = vpop.f32.mrf.mxu0
    %v391 = vadd.f32 %v141, %v390
    %392 = vmatprep.mubr.bf16.mxu0 0
    %393 = vmatmul.mubr.bf16.gmra.mxu0 %v258
    %v394 = vpop.f32.mrf.mxu0
    %v395 = vadd.f32 %v146, %v394
    %v396 = vpop.f32.mrf.mxu0
    %v397 = vadd.f32 %v146, %v396
    %v398 = vpop.f32.mrf.mxu0
    %v399 = vadd.f32 %v151, %v398
    %v400 = vpop.f32.mrf.mxu0
    %v401 = vadd.f32 %v151, %v400
    %402 = vmatprep.mubr.bf16.mxu0 0
    %403 = vmatmul.mubr.bf16.gmra.mxu0 %v261
    %v404 = vpop.f32.mrf.mxu0
    %v405 = vadd.f32 %v156, %v404
    %v406 = vpop.f32.mrf.mxu0
    %v407 = vadd.f32 %v156, %v406
    %v408 = vpop.f32.mrf.mxu0
    %v409 = vadd.f32 %v161, %v408
    %v410 = vpop.f32.mrf.mxu0
    %v411 = vadd.f32 %v161, %v410
    %412 = vmatprep.mubr.bf16.mxu0 0
    %413 = vmatmul.mubr.bf16.gmra.mxu0 %v264
    %v414 = vpop.f32.mrf.mxu0
    %v415 = vadd.f32 %v166, %v414
    %v416 = vpop.f32.mrf.mxu0
    %v417 = vadd.f32 %v166, %v416
    %v418 = vpop.f32.mrf.mxu0
    %v419 = vadd.f32 %v171, %v418
    %v420 = vpop.f32.mrf.mxu0
    %v421 = vadd.f32 %v171, %v420
    %422 = vmatprep.mubr.bf16.mxu0 0
    %423 = vmatmul.mubr.bf16.gmra.mxu0 %v267
    %v424 = vpop.f32.mrf.mxu0
    %v425 = vadd.f32 %v176, %v424
    %v426 = vpop.f32.mrf.mxu0
    %v427 = vadd.f32 %v176, %v426
    %v428 = vpop.f32.mrf.mxu0
    %v429 = vadd.f32 %v181, %v428
    %v430 = vpop.f32.mrf.mxu0
    %v431 = vadd.f32 %v181, %v430
    %432 = vmatprep.mubr.bf16.mxu0 0
    %433 = vmatmul.mubr.bf16.gmra.mxu0 %v270
    %v434 = vpop.f32.mrf.mxu0
    %v435 = vadd.f32 %v186, %v434
    %v436 = vpop.f32.mrf.mxu0
    %v437 = vadd.f32 %v186, %v436
    %v438 = vpop.f32.mrf.mxu0
    %v439 = vadd.f32 %v191, %v438
    %v440 = vpop.f32.mrf.mxu0
    %v441 = vadd.f32 %v191, %v440
    %442 = vmatprep.mubr.bf16.mxu0 0
    %443 = vmatmul.mubr.bf16.gmra.mxu0 %v273
    %v444 = vpop.f32.mrf.mxu0
    %v445 = vadd.f32 %v196, %v444
    %v446 = vpop.f32.mrf.mxu0
    %v447 = vadd.f32 %v196, %v446
    %v448 = vpop.f32.mrf.mxu0
    %v449 = vadd.f32 %v201, %v448
    %v450 = vpop.f32.mrf.mxu0
    %v451 = vadd.f32 %v201, %v450
    %452 = vmatprep.mubr.bf16.mxu0 0
    %453 = vmatmul.mubr.bf16.gmra.mxu0 %v276
    %v454 = vpop.f32.mrf.mxu0
    %v455 = vadd.f32 %v206, %v454
    %v456 = vpop.f32.mrf.mxu0
    %v457 = vadd.f32 %v206, %v456
    %v458 = vpop.f32.mrf.mxu0
    %v459 = vadd.f32 %v211, %v458
    %v460 = vpop.f32.mrf.mxu0
    %v461 = vadd.f32 %v211, %v460
    %462 = vdwg.mxu0
    %463 = vmatprep.subr.bf16.mxu0 0
    %464 = vmatpush1.bf16.xpose.msra.mxu0 %v348
    %465 = vmatprep.subr.bf16.mxu0 0
    %466 = vmatpush1.bf16.xpose.msra.mxu0 %v345
    %467 = vmatprep.subr.bf16.mxu0 0
    %468 = vmatpush1.bf16.xpose.msra.mxu0 %v342
    %469 = vmatprep.subr.bf16.mxu0 0
    %470 = vmatpush1.bf16.xpose.msra.mxu0 %v339
    %471 = vmatprep.subr.bf16.mxu0 0
    %472 = vmatpush1.bf16.xpose.msra.mxu0 %v336
    %473 = vmatprep.subr.bf16.mxu0 0
    %474 = vmatpush1.bf16.xpose.msra.mxu0 %v333
    %475 = vmatprep.subr.bf16.mxu0 0
    %476 = vmatpush1.bf16.xpose.msra.mxu0 %v330
    %477 = vmatprep.subr.bf16.mxu0 0
    %478 = vmatpush1.bf16.xpose.msra.mxu0 %v327
    %479 = vmatprep.subr.bf16.mxu0 0
    %480 = vmatpush2.bf16.xpose.msra.mxu0 0
    %481 = vmatprep.subr.bf16.mxu0 0
    %482 = vmatpush2.bf16.xpose.msra.mxu0 0
    %483 = vmatprep.subr.bf16.mxu0 0
    %484 = vmatpush2.bf16.xpose.msra.mxu0 0
    %485 = vmatprep.subr.bf16.mxu0 0
    %486 = vmatpush2.bf16.xpose.msra.mxu0 0
    %487 = vmatprep.subr.bf16.mxu0 0
    %488 = vmatpush2.bf16.xpose.msra.mxu0 0
    %489 = vmatprep.subr.bf16.mxu0 0
    %490 = vmatpush2.bf16.xpose.msra.mxu0 0
    %491 = vmatprep.subr.bf16.mxu0 0
    %492 = vmatpush2.bf16.xpose.msra.mxu0 0
    %493 = vmatprep.subr.bf16.mxu0 0
    %494 = vmatpush2.bf16.xpose.msra.mxu0 0
    %495 = vmatprep.mubr.bf16.mxu0 0
    %496 = vmatmul.mubr.bf16.gmra.mxu0 %v255
    %v497 = vpop.f32.mrf.mxu0
    %v498 = vadd.f32 %v136, %v497
    %v499 = vpop.f32.mrf.mxu0
    %v500 = vpop.f32.mrf.mxu0
    %v501 = vadd.f32 %v141, %v500
    %v502 = vpop.f32.mrf.mxu0
    %503 = vmatprep.mubr.bf16.mxu0 0
    %504 = vmatmul.mubr.bf16.gmra.mxu0 %v258
    %v505 = vpop.f32.mrf.mxu0
    %v506 = vadd.f32 %v146, %v505
    %v507 = vpop.f32.mrf.mxu0
    %v508 = vpop.f32.mrf.mxu0
    %v509 = vadd.f32 %v151, %v508
    %v510 = vpop.f32.mrf.mxu0
    %511 = vmatprep.mubr.bf16.mxu0 0
    %512 = vmatmul.mubr.bf16.gmra.mxu0 %v261
    %v513 = vpop.f32.mrf.mxu0
    %v514 = vadd.f32 %v156, %v513
    %v515 = vpop.f32.mrf.mxu0
    %v516 = vpop.f32.mrf.mxu0
    %v517 = vadd.f32 %v161, %v516
    %v518 = vpop.f32.mrf.mxu0
    %519 = vmatprep.mubr.bf16.mxu0 0
    %520 = vmatmul.mubr.bf16.gmra.mxu0 %v264
    %v521 = vpop.f32.mrf.mxu0
    %v522 = vadd.f32 %v166, %v521
    %v523 = vpop.f32.mrf.mxu0
    %v524 = vpop.f32.mrf.mxu0
    %v525 = vadd.f32 %v171, %v524
    %v526 = vpop.f32.mrf.mxu0
    %527 = vmatprep.mubr.bf16.mxu0 0
    %528 = vmatmul.mubr.bf16.gmra.mxu0 %v267
    %v529 = vpop.f32.mrf.mxu0
    %v530 = vadd.f32 %v176, %v529
    %v531 = vpop.f32.mrf.mxu0
    %v532 = vpop.f32.mrf.mxu0
    %v533 = vadd.f32 %v181, %v532
    %v534 = vpop.f32.mrf.mxu0
    %535 = vmatprep.mubr.bf16.mxu0 0
    %536 = vmatmul.mubr.bf16.gmra.mxu0 %v270
    %v537 = vpop.f32.mrf.mxu0
    %v538 = vadd.f32 %v186, %v537
    %v539 = vpop.f32.mrf.mxu0
    %v540 = vpop.f32.mrf.mxu0
    %v541 = vadd.f32 %v191, %v540
    %v542 = vpop.f32.mrf.mxu0
    %543 = vmatprep.mubr.bf16.mxu0 0
    %544 = vmatmul.mubr.bf16.gmra.mxu0 %v273
    %v545 = vpop.f32.mrf.mxu0
    %v546 = vadd.f32 %v196, %v545
    %v547 = vpop.f32.mrf.mxu0
    %v548 = vpop.f32.mrf.mxu0
    %v549 = vadd.f32 %v201, %v548
    %v550 = vpop.f32.mrf.mxu0
    %551 = vmatprep.mubr.bf16.mxu0 0
    %552 = vmatmul.mubr.bf16.gmra.mxu0 %v276
    %v553 = vpop.f32.mrf.mxu0
    %v554 = vadd.f32 %v206, %v553
    %v555 = vpop.f32.mrf.mxu0
    %v556 = vpop.f32.mrf.mxu0
    %v557 = vadd.f32 %v211, %v556
    %v558 = vpop.f32.mrf.mxu0
    %559 = vdwg.mxu0
    %v560 = vmax.f32 %v385, 0.0
    %v561 = vmax.f32 %v387, 0.0
    %v562 = vmax.f32 %v498, 0.0
    %v563 = vmax.f32 %v389, 0.0
    %v564 = vmax.f32 %v391, 0.0
    %v565 = vmax.f32 %v501, 0.0
    %v566 = vmax.f32 %v395, 0.0
    %v567 = vmax.f32 %v397, 0.0
    %v568 = vmax.f32 %v506, 0.0
    %v569 = vmax.f32 %v399, 0.0
    %v570 = vmax.f32 %v401, 0.0
    %v571 = vmax.f32 %v509, 0.0
    %v572 = vmax.f32 %v405, 0.0
    %v573 = vmax.f32 %v407, 0.0
    %v574 = vmax.f32 %v514, 0.0
    %v575 = vmax.f32 %v409, 0.0
    %v576 = vmax.f32 %v411, 0.0
    %v577 = vmax.f32 %v517, 0.0
    %v578 = vmax.f32 %v415, 0.0
    %v579 = vmax.f32 %v417, 0.0
    %v580 = vmax.f32 %v522, 0.0
    %v581 = vmax.f32 %v419, 0.0
    %v582 = vmax.f32 %v421, 0.0
    %v583 = vmax.f32 %v525, 0.0
    %v584 = vmax.f32 %v425, 0.0
    %v585 = vmax.f32 %v427, 0.0
    %v586 = vmax.f32 %v530, 0.0
    %v587 = vmax.f32 %v429, 0.0
    %v588 = vmax.f32 %v431, 0.0
    %v589 = vmax.f32 %v533, 0.0
    %v590 = vmax.f32 %v435, 0.0
    %v591 = vmax.f32 %v437, 0.0
    %v592 = vmax.f32 %v538, 0.0
    %v593 = vmax.f32 %v439, 0.0
    %v594 = vmax.f32 %v441, 0.0
    %v595 = vmax.f32 %v541, 0.0
    %v596 = vmax.f32 %v445, 0.0
    %v597 = vmax.f32 %v447, 0.0
    %v598 = vmax.f32 %v546, 0.0
    %v599 = vmax.f32 %v449, 0.0
    %v600 = vmax.f32 %v451, 0.0
    %v601 = vmax.f32 %v549, 0.0
    %v602 = vmax.f32 %v455, 0.0
    %v603 = vmax.f32 %v457, 0.0
    %v604 = vmax.f32 %v554, 0.0
    %v605 = vmax.f32 %v459, 0.0
    %v606 = vmax.f32 %v461, 0.0
    %v607 = vmax.f32 %v557, 0.0
    %v608 = vpack.c.bf16 %v563, %v560
    %v609 = vpack.c.bf16 %v564, %v561
    %v610 = vpack.c.bf16 %v565, %v562
    %v611 = vpack.c.bf16 %v569, %v566
    %v612 = vpack.c.bf16 %v570, %v567
    %v613 = vpack.c.bf16 %v571, %v568
    %v614 = vpack.c.bf16 %v575, %v572
    %v615 = vpack.c.bf16 %v576, %v573
    %v616 = vpack.c.bf16 %v577, %v574
    %v617 = vpack.c.bf16 %v581, %v578
    %v618 = vpack.c.bf16 %v582, %v579
    %v619 = vpack.c.bf16 %v583, %v580
    %v620 = vpack.c.bf16 %v587, %v584
    %v621 = vpack.c.bf16 %v588, %v585
    %v622 = vpack.c.bf16 %v589, %v586
    %v623 = vpack.c.bf16 %v593, %v590
    %v624 = vpack.c.bf16 %v594, %v591
    %v625 = vpack.c.bf16 %v595, %v592
    %v626 = vpack.c.bf16 %v599, %v596
    %v627 = vpack.c.bf16 %v600, %v597
    %v628 = vpack.c.bf16 %v601, %v598
    %v629 = vpack.c.bf16 %v605, %v602
    %v630 = vpack.c.bf16 %v606, %v603
    %v631 = vpack.c.bf16 %v607, %v604
    %v632 = vld [vmem:[%s3] sm:$0xf]
    %v633 = vld [vmem:[%s3 + $0x4] sm:$0xf]
    %v634 = vld [vmem:[%s3 + $0x8] sm:$0xf]
    %v635 = vld [vmem:[%s3 + $0xc] sm:$0xf]
    %v636 = vld [vmem:[%s3 + $0x10] sm:$0xf]
    %v637 = vld [vmem:[%s3 + $0x14] sm:$0xf]
    %v638 = vld [vmem:[%s3 + $0x18] sm:$0xf]
    %v639 = vld [vmem:[%s3 + $0x1c] sm:$0xf]
    %v640 = vld [vmem:[%s3 + $0x20] sm:$0xf]
    %v641 = vld [vmem:[%s3 + $0x24] sm:$0xf]
    %v642 = vld [vmem:[%s3 + $0x28] sm:$0xf]
    %v643 = vld [vmem:[%s3 + $0x2c] sm:$0xf]
    %v644 = vld [vmem:[%s3 + $0x30] sm:$0xf]
    %v645 = vld [vmem:[%s3 + $0x34] sm:$0xf]
    %v646 = vld [vmem:[%s3 + $0x38] sm:$0xf]
    %v647 = vld [vmem:[%s3 + $0x3c] sm:$0xf]
    %v648 = vld [vmem:[%s4] sm:$0xff]
    %v649 = vld [vmem:[%s4 + $0x8] sm:$0xff]
    %v650 = vld [vmem:[%s4 + $0x10] sm:$0xff]
    %v651 = vld [vmem:[%s4 + $0x18] sm:$0xff]
    %v652 = vld [vmem:[%s4 + $0x20] sm:$0xff]
    %v653 = vld [vmem:[%s4 + $0x28] sm:$0xff]
    %v654 = vld [vmem:[%s4 + $0x30] sm:$0xff]
    %v655 = vld [vmem:[%s4 + $0x38] sm:$0xff]
    %v656 = vld [vmem:[%s4 + $0x40] sm:$0xff]
    %v657 = vld [vmem:[%s4 + $0x48] sm:$0xff]
    %v658 = vld [vmem:[%s4 + $0x50] sm:$0xff]
    %v659 = vld [vmem:[%s4 + $0x58] sm:$0xff]
    %v660 = vld [vmem:[%s4 + $0x60] sm:$0xff]
    %v661 = vld [vmem:[%s4 + $0x68] sm:$0xff]
    %v662 = vld [vmem:[%s4 + $0x70] sm:$0xff]
    %v663 = vld [vmem:[%s4 + $0x78] sm:$0xff]
    %665 = vset.pattern.permute.xlu0 0
    %666 = vperm.xlu0 %665, %v648
    %v667 = vpop.permute.xlu0 %666
    %670 = vset.pattern.permute.xlu0 0
    %671 = vperm.xlu0 %670, %v649
    %v672 = vpop.permute.xlu0 %671
    %675 = vset.pattern.permute.xlu0 0
    %676 = vperm.xlu0 %675, %v650
    %v677 = vpop.permute.xlu0 %676
    %680 = vset.pattern.permute.xlu0 0
    %681 = vperm.xlu0 %680, %v651
    %v682 = vpop.permute.xlu0 %681
    %685 = vset.pattern.permute.xlu0 0
    %686 = vperm.xlu0 %685, %v652
    %v687 = vpop.permute.xlu0 %686
    %690 = vset.pattern.permute.xlu0 0
    %691 = vperm.xlu0 %690, %v653
    %v692 = vpop.permute.xlu0 %691
    %695 = vset.pattern.permute.xlu0 0
    %696 = vperm.xlu0 %695, %v654
    %v697 = vpop.permute.xlu0 %696
    %700 = vset.pattern.permute.xlu0 0
    %701 = vperm.xlu0 %700, %v655
    %v702 = vpop.permute.xlu0 %701
    %705 = vset.pattern.permute.xlu0 0
    %706 = vperm.xlu0 %705, %v656
    %v707 = vpop.permute.xlu0 %706
    %710 = vset.pattern.permute.xlu0 0
    %711 = vperm.xlu0 %710, %v657
    %v712 = vpop.permute.xlu0 %711
    %715 = vset.pattern.permute.xlu0 0
    %716 = vperm.xlu0 %715, %v658
    %v717 = vpop.permute.xlu0 %716
    %720 = vset.pattern.permute.xlu0 0
    %721 = vperm.xlu0 %720, %v659
    %v722 = vpop.permute.xlu0 %721
    %725 = vset.pattern.permute.xlu0 0
    %726 = vperm.xlu0 %725, %v660
    %v727 = vpop.permute.xlu0 %726
    %730 = vset.pattern.permute.xlu0 0
    %731 = vperm.xlu0 %730, %v661
    %v732 = vpop.permute.xlu0 %731
    %735 = vset.pattern.permute.xlu0 0
    %736 = vperm.xlu0 %735, %v662
    %v737 = vpop.permute.xlu0 %736
    %740 = vset.pattern.permute.xlu0 0
    %741 = vperm.xlu0 %740, %v663
    %v742 = vpop.permute.xlu0 %741
    %v760 = vunpack.c.l.b16 %v632
    %v761 = vunpack.c.l.b16 %v633
    %v762 = vunpack.c.l.b16 %v634
    %v763 = vunpack.c.l.b16 %v635
    %v764 = vunpack.c.l.b16 %v636
    %v765 = vunpack.c.l.b16 %v637
    %v766 = vunpack.c.l.b16 %v638
    %v767 = vunpack.c.l.b16 %v639
    %v768 = vunpack.c.l.b16 %v640
    %v769 = vunpack.c.l.b16 %v641
    %v770 = vunpack.c.l.b16 %v642
    %v771 = vunpack.c.l.b16 %v643
    %v772 = vunpack.c.l.b16 %v644
    %v773 = vunpack.c.l.b16 %v645
    %v774 = vunpack.c.l.b16 %v646
    %v775 = vunpack.c.l.b16 %v647
    %v776 = vpack.c.b16 %v761, %v760
    %v777 = vpack.c.b16 %v763, %v762
    %v778 = vpack.c.b16 %v765, %v764
    %v779 = vpack.c.b16 %v767, %v766
    %v780 = vpack.c.b16 %v769, %v768
    %v781 = vpack.c.b16 %v771, %v770
    %v782 = vpack.c.b16 %v773, %v772
    %v783 = vpack.c.b16 %v775, %v774
    %792 = vmatprep.subr.bf16.mxu0 %v630
    %793 = vmatpush1.bf16.msra.mxu0 %v629
    %794 = vmatprep.subr.bf16.mxu0 %v627
    %795 = vmatpush1.bf16.msra.mxu0 %v626
    %796 = vmatprep.subr.bf16.mxu0 %v624
    %797 = vmatpush1.bf16.msra.mxu0 %v623
    %798 = vmatprep.subr.bf16.mxu0 %v621
    %799 = vmatpush1.bf16.msra.mxu0 %v620
    %800 = vmatprep.subr.bf16.mxu0 %v618
    %801 = vmatpush1.bf16.msra.mxu0 %v617
    %802 = vmatprep.subr.bf16.mxu0 %v615
    %803 = vmatpush1.bf16.msra.mxu0 %v614
    %804 = vmatprep.subr.bf16.mxu0 %v612
    %805 = vmatpush1.bf16.msra.mxu0 %v611
    %806 = vmatprep.subr.bf16.mxu0 %v609
    %807 = vmatpush1.bf16.msra.mxu0 %v608
    %808 = vmatprep.subr.bf16.mxu0 0
    %809 = vmatpush2.bf16.msra.mxu0 0
    %810 = vmatprep.subr.bf16.mxu0 0
    %811 = vmatpush2.bf16.msra.mxu0 0
    %812 = vmatprep.subr.bf16.mxu0 0
    %813 = vmatpush2.bf16.msra.mxu0 0
    %814 = vmatprep.subr.bf16.mxu0 0
    %815 = vmatpush2.bf16.msra.mxu0 0
    %816 = vmatprep.subr.bf16.mxu0 0
    %817 = vmatpush2.bf16.msra.mxu0 0
    %818 = vmatprep.subr.bf16.mxu0 0
    %819 = vmatpush2.bf16.msra.mxu0 0
    %820 = vmatprep.subr.bf16.mxu0 0
    %821 = vmatpush2.bf16.msra.mxu0 0
    %822 = vmatprep.subr.bf16.mxu0 0
    %823 = vmatpush2.bf16.msra.mxu0 0
    %824 = vmatprep.mubr.bf16.mxu0 0
    %825 = vmatmul.mubr.bf16.gmra.mxu0 %v776
    %v826 = vpop.f32.mrf.mxu0
    %v827 = vadd.f32 %v667, %v826
    %v828 = vpop.f32.mrf.mxu0
    %v829 = vadd.f32 %v667, %v828
    %v830 = vpop.f32.mrf.mxu0
    %v831 = vadd.f32 %v672, %v830
    %v832 = vpop.f32.mrf.mxu0
    %v833 = vadd.f32 %v672, %v832
    %834 = vmatprep.mubr.bf16.mxu0 0
    %835 = vmatmul.mubr.bf16.gmra.mxu0 %v777
    %v836 = vpop.f32.mrf.mxu0
    %v837 = vadd.f32 %v677, %v836
    %v838 = vpop.f32.mrf.mxu0
    %v839 = vadd.f32 %v677, %v838
    %v840 = vpop.f32.mrf.mxu0
    %v841 = vadd.f32 %v682, %v840
    %v842 = vpop.f32.mrf.mxu0
    %v843 = vadd.f32 %v682, %v842
    %844 = vmatprep.mubr.bf16.mxu0 0
    %845 = vmatmul.mubr.bf16.gmra.mxu0 %v778
    %v846 = vpop.f32.mrf.mxu0
    %v847 = vadd.f32 %v687, %v846
    %v848 = vpop.f32.mrf.mxu0
    %v849 = vadd.f32 %v687, %v848
    %v850 = vpop.f32.mrf.mxu0
    %v851 = vadd.f32 %v692, %v850
    %v852 = vpop.f32.mrf.mxu0
    %v853 = vadd.f32 %v692, %v852
    %854 = vmatprep.mubr.bf16.mxu0 0
    %855 = vmatmul.mubr.bf16.gmra.mxu0 %v779
    %v856 = vpop.f32.mrf.mxu0
    %v857 = vadd.f32 %v697, %v856
    %v858 = vpop.f32.mrf.mxu0
    %v859 = vadd.f32 %v697, %v858
    %v860 = vpop.f32.mrf.mxu0
    %v861 = vadd.f32 %v702, %v860
    %v862 = vpop.f32.mrf.mxu0
    %v863 = vadd.f32 %v702, %v862
    %864 = vmatprep.mubr.bf16.mxu0 0
    %865 = vmatmul.mubr.bf16.gmra.mxu0 %v780
    %v866 = vpop.f32.mrf.mxu0
    %v867 = vadd.f32 %v707, %v866
    %v868 = vpop.f32.mrf.mxu0
    %v869 = vadd.f32 %v707, %v868
    %v870 = vpop.f32.mrf.mxu0
    %v871 = vadd.f32 %v712, %v870
    %v872 = vpop.f32.mrf.mxu0
    %v873 = vadd.f32 %v712, %v872
    %874 = vmatprep.mubr.bf16.mxu0 0
    %875 = vmatmul.mubr.bf16.gmra.mxu0 %v781
    %v876 = vpop.f32.mrf.mxu0
    %v877 = vadd.f32 %v717, %v876
    %v878 = vpop.f32.mrf.mxu0
    %v879 = vadd.f32 %v717, %v878
    %v880 = vpop.f32.mrf.mxu0
    %v881 = vadd.f32 %v722, %v880
    %v882 = vpop.f32.mrf.mxu0
    %v883 = vadd.f32 %v722, %v882
    %884 = vmatprep.mubr.bf16.mxu0 0
    %885 = vmatmul.mubr.bf16.gmra.mxu0 %v782
    %v886 = vpop.f32.mrf.mxu0
    %v887 = vadd.f32 %v727, %v886
    %v888 = vpop.f32.mrf.mxu0
    %v889 = vadd.f32 %v727, %v888
    %v890 = vpop.f32.mrf.mxu0
    %v891 = vadd.f32 %v732, %v890
    %v892 = vpop.f32.mrf.mxu0
    %v893 = vadd.f32 %v732, %v892
    %894 = vmatprep.mubr.bf16.mxu0 0
    %895 = vmatmul.mubr.bf16.gmra.mxu0 %v783
    %v896 = vpop.f32.mrf.mxu0
    %v897 = vadd.f32 %v737, %v896
    %v898 = vpop.f32.mrf.mxu0
    %v899 = vadd.f32 %v737, %v898
    %v900 = vpop.f32.mrf.mxu0
    %v901 = vadd.f32 %v742, %v900
    %v902 = vpop.f32.mrf.mxu0
    %v903 = vadd.f32 %v742, %v902
    %904 = vdwg.mxu0
    %905 = vmatprep.subr.bf16.mxu0 0
    %906 = vmatpush1.bf16.msra.mxu0 %v631
    %907 = vmatprep.subr.bf16.mxu0 0
    %908 = vmatpush1.bf16.msra.mxu0 %v628
    %909 = vmatprep.subr.bf16.mxu0 0
    %910 = vmatpush1.bf16.msra.mxu0 %v625
    %911 = vmatprep.subr.bf16.mxu0 0
    %912 = vmatpush1.bf16.msra.mxu0 %v622
    %913 = vmatprep.subr.bf16.mxu0 0
    %914 = vmatpush1.bf16.msra.mxu0 %v619
    %915 = vmatprep.subr.bf16.mxu0 0
    %916 = vmatpush1.bf16.msra.mxu0 %v616
    %917 = vmatprep.subr.bf16.mxu0 0
    %918 = vmatpush1.bf16.msra.mxu0 %v613
    %919 = vmatprep.subr.bf16.mxu0 0
    %920 = vmatpush1.bf16.msra.mxu0 %v610
    %921 = vmatprep.subr.bf16.mxu0 0
    %922 = vmatpush2.bf16.msra.mxu0 0
    %923 = vmatprep.subr.bf16.mxu0 0
    %924 = vmatpush2.bf16.msra.mxu0 0
    %925 = vmatprep.subr.bf16.mxu0 0
    %926 = vmatpush2.bf16.msra.mxu0 0
    %927 = vmatprep.subr.bf16.mxu0 0
    %928 = vmatpush2.bf16.msra.mxu0 0
    %929 = vmatprep.subr.bf16.mxu0 0
    %930 = vmatpush2.bf16.msra.mxu0 0
    %931 = vmatprep.subr.bf16.mxu0 0
    %932 = vmatpush2.bf16.msra.mxu0 0
    %933 = vmatprep.subr.bf16.mxu0 0
    %934 = vmatpush2.bf16.msra.mxu0 0
    %935 = vmatprep.subr.bf16.mxu0 0
    %936 = vmatpush2.bf16.msra.mxu0 0
    %937 = vmatprep.mubr.bf16.mxu0 0
    %938 = vmatmul.mubr.bf16.gmra.mxu0 %v776
    %v939 = vpop.f32.mrf.mxu0
    %v940 = vadd.f32 %v667, %v939
    %v941 = vpop.f32.mrf.mxu0
    %v942 = vpop.f32.mrf.mxu0
    %v943 = vadd.f32 %v672, %v942
    %v944 = vpop.f32.mrf.mxu0
    %945 = vmatprep.mubr.bf16.mxu0 0
    %946 = vmatmul.mubr.bf16.gmra.mxu0 %v777
    %v947 = vpop.f32.mrf.mxu0
    %v948 = vadd.f32 %v677, %v947
    %v949 = vpop.f32.mrf.mxu0
    %v950 = vpop.f32.mrf.mxu0
    %v951 = vadd.f32 %v682, %v950
    %v952 = vpop.f32.mrf.mxu0
    %953 = vmatprep.mubr.bf16.mxu0 0
    %954 = vmatmul.mubr.bf16.gmra.mxu0 %v778
    %v955 = vpop.f32.mrf.mxu0
    %v956 = vadd.f32 %v687, %v955
    %v957 = vpop.f32.mrf.mxu0
    %v958 = vpop.f32.mrf.mxu0
    %v959 = vadd.f32 %v692, %v958
    %v960 = vpop.f32.mrf.mxu0
    %961 = vmatprep.mubr.bf16.mxu0 0
    %962 = vmatmul.mubr.bf16.gmra.mxu0 %v779
    %v963 = vpop.f32.mrf.mxu0
    %v964 = vadd.f32 %v697, %v963
    %v965 = vpop.f32.mrf.mxu0
    %v966 = vpop.f32.mrf.mxu0
    %v967 = vadd.f32 %v702, %v966
    %v968 = vpop.f32.mrf.mxu0
    %969 = vmatprep.mubr.bf16.mxu0 0
    %970 = vmatmul.mubr.bf16.gmra.mxu0 %v780
    %v971 = vpop.f32.mrf.mxu0
    %v972 = vadd.f32 %v707, %v971
    %v973 = vpop.f32.mrf.mxu0
    %v974 = vpop.f32.mrf.mxu0
    %v975 = vadd.f32 %v712, %v974
    %v976 = vpop.f32.mrf.mxu0
    %977 = vmatprep.mubr.bf16.mxu0 0
    %978 = vmatmul.mubr.bf16.gmra.mxu0 %v781
    %v979 = vpop.f32.mrf.mxu0
    %v980 = vadd.f32 %v717, %v979
    %v981 = vpop.f32.mrf.mxu0
    %v982 = vpop.f32.mrf.mxu0
    %v983 = vadd.f32 %v722, %v982
    %v984 = vpop.f32.mrf.mxu0
    %985 = vmatprep.mubr.bf16.mxu0 0
    %986 = vmatmul.mubr.bf16.gmra.mxu0 %v782
    %v987 = vpop.f32.mrf.mxu0
    %v988 = vadd.f32 %v727, %v987
    %v989 = vpop.f32.mrf.mxu0
    %v990 = vpop.f32.mrf.mxu0
    %v991 = vadd.f32 %v732, %v990
    %v992 = vpop.f32.mrf.mxu0
    %993 = vmatprep.mubr.bf16.mxu0 0
    %994 = vmatmul.mubr.bf16.gmra.mxu0 %v783
    %v995 = vpop.f32.mrf.mxu0
    %v996 = vadd.f32 %v737, %v995
    %v997 = vpop.f32.mrf.mxu0
    %v998 = vpop.f32.mrf.mxu0
    %v999 = vadd.f32 %v742, %v998
    %v1000 = vpop.f32.mrf.mxu0
    %1001 = vdwg.mxu0
    %v1002 = vmax.f32 %v827, 0.0
    %v1003 = vmax.f32 %v829, 0.0
    %v1004 = vmax.f32 %v940, 0.0
    %v1005 = vmax.f32 %v831, 0.0
    %v1006 = vmax.f32 %v833, 0.0
    %v1007 = vmax.f32 %v943, 0.0
    %v1008 = vmax.f32 %v837, 0.0
    %v1009 = vmax.f32 %v839, 0.0
    %v1010 = vmax.f32 %v948, 0.0
    %v1011 = vmax.f32 %v841, 0.0
    %v1012 = vmax.f32 %v843, 0.0
    %v1013 = vmax.f32 %v951, 0.0
    %v1014 = vmax.f32 %v847, 0.0
    %v1015 = vmax.f32 %v849, 0.0
    %v1016 = vmax.f32 %v956, 0.0
    %v1017 = vmax.f32 %v851, 0.0
    %v1018 = vmax.f32 %v853, 0.0
    %v1019 = vmax.f32 %v959, 0.0
    %v1020 = vmax.f32 %v857, 0.0
    %v1021 = vmax.f32 %v859, 0.0
    %v1022 = vmax.f32 %v964, 0.0
    %v1023 = vmax.f32 %v861, 0.0
    %v1024 = vmax.f32 %v863, 0.0
    %v1025 = vmax.f32 %v967, 0.0
    %v1026 = vmax.f32 %v867, 0.0
    %v1027 = vmax.f32 %v869, 0.0
    %v1028 = vmax.f32 %v972, 0.0
    %v1029 = vmax.f32 %v871, 0.0
    %v1030 = vmax.f32 %v873, 0.0
    %v1031 = vmax.f32 %v975, 0.0
    %v1032 = vmax.f32 %v877, 0.0
    %v1033 = vmax.f32 %v879, 0.0
    %v1034 = vmax.f32 %v980, 0.0
    %v1035 = vmax.f32 %v881, 0.0
    %v1036 = vmax.f32 %v883, 0.0
    %v1037 = vmax.f32 %v983, 0.0
    %v1038 = vmax.f32 %v887, 0.0
    %v1039 = vmax.f32 %v889, 0.0
    %v1040 = vmax.f32 %v988, 0.0
    %v1041 = vmax.f32 %v891, 0.0
    %v1042 = vmax.f32 %v893, 0.0
    %v1043 = vmax.f32 %v991, 0.0
    %v1044 = vmax.f32 %v897, 0.0
    %v1045 = vmax.f32 %v899, 0.0
    %v1046 = vmax.f32 %v996, 0.0
    %v1047 = vmax.f32 %v901, 0.0
    %v1048 = vmax.f32 %v903, 0.0
    %v1049 = vmax.f32 %v999, 0.0
    %v1050 = vld [vmem:[%s5] sm:$0xff]
    %v1051 = vld [vmem:[%s5 + $0x8] sm:$0xff]
    %v1052 = vld [vmem:[%s5 + $0x10] sm:$0xff]
    %v1053 = vld [vmem:[%s5 + $0x18] sm:$0xff]
    %v1054 = vld [vmem:[%s5 + $0x20] sm:$0xff]
    %v1055 = vld [vmem:[%s5 + $0x28] sm:$0xff]
    %v1056 = vld [vmem:[%s5 + $0x30] sm:$0xff]
    %v1057 = vld [vmem:[%s5 + $0x38] sm:$0xff]
    %v1058 = vld [vmem:[%s5 + $0x40] sm:$0xff]
    %v1059 = vld [vmem:[%s5 + $0x48] sm:$0xff]
    %v1060 = vld [vmem:[%s5 + $0x50] sm:$0xff]
    %v1061 = vld [vmem:[%s5 + $0x58] sm:$0xff]
    %v1062 = vld [vmem:[%s5 + $0x60] sm:$0xff]
    %v1063 = vld [vmem:[%s5 + $0x68] sm:$0xff]
    %v1064 = vld [vmem:[%s5 + $0x70] sm:$0xff]
    %v1065 = vld [vmem:[%s5 + $0x78] sm:$0xff]
    %1067 = vset.pattern.permute.xlu0 0
    %1068 = vperm.xlu0 %1067, %v1050
    %v1069 = vpop.permute.xlu0 %1068
    %1072 = vset.pattern.permute.xlu0 0
    %1073 = vperm.xlu0 %1072, %v1051
    %v1074 = vpop.permute.xlu0 %1073
    %1077 = vset.pattern.permute.xlu0 0
    %1078 = vperm.xlu0 %1077, %v1052
    %v1079 = vpop.permute.xlu0 %1078
    %1082 = vset.pattern.permute.xlu0 0
    %1083 = vperm.xlu0 %1082, %v1053
    %v1084 = vpop.permute.xlu0 %1083
    %1087 = vset.pattern.permute.xlu0 0
    %1088 = vperm.xlu0 %1087, %v1054
    %v1089 = vpop.permute.xlu0 %1088
    %1092 = vset.pattern.permute.xlu0 0
    %1093 = vperm.xlu0 %1092, %v1055
    %v1094 = vpop.permute.xlu0 %1093
    %1097 = vset.pattern.permute.xlu0 0
    %1098 = vperm.xlu0 %1097, %v1056
    %v1099 = vpop.permute.xlu0 %1098
    %1102 = vset.pattern.permute.xlu0 0
    %1103 = vperm.xlu0 %1102, %v1057
    %v1104 = vpop.permute.xlu0 %1103
    %1107 = vset.pattern.permute.xlu0 0
    %1108 = vperm.xlu0 %1107, %v1058
    %v1109 = vpop.permute.xlu0 %1108
    %1112 = vset.pattern.permute.xlu0 0
    %1113 = vperm.xlu0 %1112, %v1059
    %v1114 = vpop.permute.xlu0 %1113
    %1117 = vset.pattern.permute.xlu0 0
    %1118 = vperm.xlu0 %1117, %v1060
    %v1119 = vpop.permute.xlu0 %1118
    %1122 = vset.pattern.permute.xlu0 0
    %1123 = vperm.xlu0 %1122, %v1061
    %v1124 = vpop.permute.xlu0 %1123
    %1127 = vset.pattern.permute.xlu0 0
    %1128 = vperm.xlu0 %1127, %v1062
    %v1129 = vpop.permute.xlu0 %1128
    %1132 = vset.pattern.permute.xlu0 0
    %1133 = vperm.xlu0 %1132, %v1063
    %v1134 = vpop.permute.xlu0 %1133
    %1137 = vset.pattern.permute.xlu0 0
    %1138 = vperm.xlu0 %1137, %v1064
    %v1139 = vpop.permute.xlu0 %1138
    %1142 = vset.pattern.permute.xlu0 0
    %1143 = vperm.xlu0 %1142, %v1065
    %v1144 = vpop.permute.xlu0 %1143
    %v1146 = vmul.f32 %v1002, %v1069
    %v1147 = vmul.f32 %v1003, %v1069
    %v1148 = vmul.f32 %v1004, %v1069
    %v1149 = vmul.f32 %v1005, %v1074
    %v1150 = vmul.f32 %v1006, %v1074
    %v1151 = vmul.f32 %v1007, %v1074
    %v1152 = vmul.f32 %v1008, %v1079
    %v1153 = vmul.f32 %v1009, %v1079
    %v1154 = vmul.f32 %v1010, %v1079
    %v1155 = vmul.f32 %v1011, %v1084
    %v1156 = vmul.f32 %v1012, %v1084
    %v1157 = vmul.f32 %v1013, %v1084
    %v1158 = vmul.f32 %v1014, %v1089
    %v1159 = vmul.f32 %v1015, %v1089
    %v1160 = vmul.f32 %v1016, %v1089
    %v1161 = vmul.f32 %v1017, %v1094
    %v1162 = vmul.f32 %v1018, %v1094
    %v1163 = vmul.f32 %v1019, %v1094
    %v1164 = vmul.f32 %v1020, %v1099
    %v1165 = vmul.f32 %v1021, %v1099
    %v1166 = vmul.f32 %v1022, %v1099
    %v1167 = vmul.f32 %v1023, %v1104
    %v1168 = vmul.f32 %v1024, %v1104
    %v1169 = vmul.f32 %v1025, %v1104
    %v1170 = vmul.f32 %v1026, %v1109
    %v1171 = vmul.f32 %v1027, %v1109
    %v1172 = vmul.f32 %v1028, %v1109
    %v1173 = vmul.f32 %v1029, %v1114
    %v1174 = vmul.f32 %v1030, %v1114
    %v1175 = vmul.f32 %v1031, %v1114
    %v1176 = vmul.f32 %v1032, %v1119
    %v1177 = vmul.f32 %v1033, %v1119
    %v1178 = vmul.f32 %v1034, %v1119
    %v1179 = vmul.f32 %v1035, %v1124
    %v1180 = vmul.f32 %v1036, %v1124
    %v1181 = vmul.f32 %v1037, %v1124
    %v1182 = vmul.f32 %v1038, %v1129
    %v1183 = vmul.f32 %v1039, %v1129
    %v1184 = vmul.f32 %v1040, %v1129
    %v1185 = vmul.f32 %v1041, %v1134
    %v1186 = vmul.f32 %v1042, %v1134
    %v1187 = vmul.f32 %v1043, %v1134
    %v1188 = vmul.f32 %v1044, %v1139
    %v1189 = vmul.f32 %v1045, %v1139
    %v1190 = vmul.f32 %v1046, %v1139
    %v1191 = vmul.f32 %v1047, %v1144
    %v1192 = vmul.f32 %v1048, %v1144
    %v1193 = vmul.f32 %v1049, %v1144
    %v1194 = vadd.f32 %v1146, %v1149
    %v1195 = vadd.f32 %v1194, %v1152
    %v1196 = vadd.f32 %v1195, %v1155
    %v1197 = vadd.f32 %v1196, %v1158
    %v1198 = vadd.f32 %v1197, %v1161
    %v1199 = vadd.f32 %v1198, %v1164
    %v1200 = vadd.f32 %v1199, %v1167
    %v1201 = vadd.f32 %v1200, %v1170
    %v1202 = vadd.f32 %v1201, %v1173
    %v1203 = vadd.f32 %v1202, %v1176
    %v1204 = vadd.f32 %v1203, %v1179
    %v1205 = vadd.f32 %v1204, %v1182
    %v1206 = vadd.f32 %v1205, %v1185
    %v1207 = vadd.f32 %v1206, %v1188
    %v1208 = vadd.f32 %v1207, %v1191
    %v1209 = vrot.slane %v1208, 4
    %v1210 = vadd.f32 %v1208, %v1209
    %v1211 = vrot.slane %v1210, 2
    %v1212 = vadd.f32 %v1210, %v1211
    %v1213 = vrot.slane %v1212, 1
    %v1214 = vadd.f32 %v1212, %v1213
    %v1215 = vadd.f32 %v1147, %v1150
    %v1216 = vadd.f32 %v1215, %v1153
    %v1217 = vadd.f32 %v1216, %v1156
    %v1218 = vadd.f32 %v1217, %v1159
    %v1219 = vadd.f32 %v1218, %v1162
    %v1220 = vadd.f32 %v1219, %v1165
    %v1221 = vadd.f32 %v1220, %v1168
    %v1222 = vadd.f32 %v1221, %v1171
    %v1223 = vadd.f32 %v1222, %v1174
    %v1224 = vadd.f32 %v1223, %v1177
    %v1225 = vadd.f32 %v1224, %v1180
    %v1226 = vadd.f32 %v1225, %v1183
    %v1227 = vadd.f32 %v1226, %v1186
    %v1228 = vadd.f32 %v1227, %v1189
    %v1229 = vadd.f32 %v1228, %v1192
    %v1230 = vrot.slane %v1229, 4
    %v1231 = vadd.f32 %v1229, %v1230
    %v1232 = vrot.slane %v1231, 2
    %v1233 = vadd.f32 %v1231, %v1232
    %v1234 = vrot.slane %v1233, 1
    %v1235 = vadd.f32 %v1233, %v1234
    %v1236 = vadd.f32 %v1148, %v1151
    %v1237 = vadd.f32 %v1236, %v1154
    %v1238 = vadd.f32 %v1237, %v1157
    %v1239 = vadd.f32 %v1238, %v1160
    %v1240 = vadd.f32 %v1239, %v1163
    %v1241 = vadd.f32 %v1240, %v1166
    %v1242 = vadd.f32 %v1241, %v1169
    %v1243 = vadd.f32 %v1242, %v1172
    %v1244 = vadd.f32 %v1243, %v1175
    %v1245 = vadd.f32 %v1244, %v1178
    %v1246 = vadd.f32 %v1245, %v1181
    %v1247 = vadd.f32 %v1246, %v1184
    %v1248 = vadd.f32 %v1247, %v1187
    %v1249 = vadd.f32 %v1248, %v1190
    %v1250 = vadd.f32 %v1249, %v1193
    %v1251 = vrot.slane %v1250, 4
    %v1252 = vadd.f32 %v1250, %v1251
    %v1253 = vrot.slane %v1252, 2
    %v1254 = vadd.f32 %v1252, %v1253
    %v1255 = vrot.slane %v1254, 1
    %v1256 = vadd.f32 %v1254, %v1255
    %s1257 = sld [smem:[#allocation2]]
    %v1258 = vstv %s1257
    %v1259 = vadd.f32 %v1214, %v1258
    %v1260 = vadd.f32 %v1235, %v1258
    %v1261 = vadd.f32 %v1256, %v1258
    %v1262 = vsub.f32 0.0, %v1259
    %v1263 = vsub.f32 0.0, %v1260
    %v1264 = vsub.f32 0.0, %v1261
    %v1265 = vmul.f32 %v1262, 1.442695
    %v1266 = vpow.pop %v1265
    %v1267 = vmul.f32 %v1263, 1.442695
    %v1268 = vpow.pop %v1267
    %v1269 = vmul.f32 %v1264, 1.442695
    %v1270 = vpow.pop %v1269
    %v1271 = vadd.f32 %v1266, 1.0
    %v1272 = vadd.f32 %v1268, 1.0
    %v1273 = vadd.f32 %v1270, 1.0
    %v1274 = vrcp.pop %v1271
    %v1275 = vmul.f32 1.0, %v1274
    %v1276 = vrcp.pop %v1272
    %v1277 = vmul.f32 1.0, %v1276
    %v1278 = vrcp.pop %v1273
    %v1279 = vmul.f32 1.0, %v1278
    %v1283 = vcombine.low %v1275, %v1277
    %v1285 = vunpack.c.l.s4 1966171168
    %v1286 = vunpack.c.0.s8 %v1285
    %v1287 = vlaneseq
    %v1288 = vshrl.u32 %v1287, 7
    %v1289 = vsub.s32 %v1286, %v1288
    %v1290 = vrot.slane %v1283, %v1289
    %v1292 = vunpack.c.l.s4 1966171168
    %v1293 = vunpack.c.0.s8 %v1292
    %v1294 = vlaneseq
    %v1295 = vshrl.u32 %v1294, 7
    %v1296 = vsub.s32 %v1293, %v1295
    %v1297 = vrot.slane %v1279, %v1296
    %v1298 = vcombine.low %v1290, %v1297
    %v1300 = vunpack.c.l.s4 1966171168
    %v1301 = vunpack.c.0.s8 %v1300
    %v1302 = vlaneseq
    %v1303 = vshrl.u32 %v1302, 7
    %v1304 = vsub.s32 %v1301, %v1303
    %v1305 = vrot.slane %v1298, %v1304
    %v1307 = vlaneseq
    %vm1308 = vcmp.ge.s32.totalorder %v1307, 0
    %vm1309 = vcmp.lt.s32.totalorder %v1307, 384
    %vm1310 = vmand %vm1308, %vm1309
    %1311 = vst.msk [vmem:[#allocation3] sm:$0x7] %vm1310, %v1305
    // Predicated region
    $region30: #{tpu_custom_call.1} parent=1 // pred_check
      _
    $region31: #{tpu_custom_call.1} parent=1 // pred_check_branch
      %1313 = sbr.rel (0) target = $region33
    $region32: #{tpu_custom_call.1} parent=1 // pred_region
      %s1315 = ssub.s32 48, 48
      %1316 = vsyncadd [#allocation4], %s1315
      %s1318 = sshll.u32 [#allocation3], 4
      %s1319 = int_to_ptr.vmem [resolvable:$true] %s1318
      %1321 = dma.vmem_to_hbm [thread:$0]  %s1319, 48, %s7, [#allocation4]
    $region33: #{tpu_custom_call.1} parent=1 // pred_fallthru
      _
    // Predicated region
    $region34: #{tpu_custom_call.1} parent=1 // pred_check
      _
    $region35: #{tpu_custom_call.1} parent=1 // pred_check_branch
      %1323 = sbr.rel (0) target = $region37
    $region36: #{tpu_custom_call.1} parent=1 // pred_region
      %1324 = dma.done [#allocation4], 48
    $region37: #{tpu_custom_call.1} parent=1 // pred_fallthru
      _
    %1325 = vsyncpa [#allocation4], 1

</llo_original>
